<compile_context>
chip_gen: v7x
topology: tpu7x:2x2x1
jax: 0.10.0
libtpu: 0.0.40
codegen_flags: <defaults>
</compile_context>

<pallas_src>
from functools import partial

import jax
import jax.numpy as jnp
from jax.experimental import pallas as pl
from jax.experimental.pallas import tpu as pltpu


def _softplus(r):
    # Exact match of torch.log(1 + torch.exp(rho)).  Intentionally the naive
    # (overflow-prone for rho >~ 88) form to mirror the PyTorch reference
    # (note: torch's F.softplus is thresholded, this module's hand-written
    # log(1+exp(.)) is not).
    return jnp.log(1.0 + jnp.exp(r))


def mlp_bbb_kernel(pars_ref, x_ref, out_ref, *, compute_dtype):
    """One (TR, TC) batch tile.

    pars_ref : (H, 16) f32, resident across the grid (constant index_map).
        columns 0..2  : w1_mu, w1_rho, eps_w1   (hidden weight, in_features=1)
        columns 3..5  : b1_mu, b1_rho, eps_b1   (hidden bias)
        columns 6..8  : w2_mu, w2_rho, eps_w2   (output weight, out_features=1)
        columns 9..11 : row 0 holds b2_mu, b2_rho, eps_b2 (output bias scalars)
    x_ref   : (TR, TC) f32 batch points, sublane- and lane-dense.
    out_ref : (TR, TC) f32 output tile (dense HBM writeback).
    """
    p = pars_ref[...]                                               # (H, 16), one load

    # Reparameterization: w = mu + softplus(rho) * eps  (kept in f32).
    # Recomputed per grid step on purpose: ~4*H softplus vs TR*H*TC tanh per
    # step (<<1% of EUP work), which keeps the grid axis safely "parallel".
    w1 = p[:, 0:1] + _softplus(p[:, 1:2]) * p[:, 2:3]               # (H, 1)
    b1 = p[:, 3:4] + _softplus(p[:, 4:5]) * p[:, 5:6]               # (H, 1)
    w2 = p[:, 6:7] + _softplus(p[:, 7:8]) * p[:, 8:9]               # (H, 1)
    b2 = p[0:1, 9:10] + _softplus(p[0:1, 10:11]) * p[0:1, 11:12]    # (1, 1)

    w1c = w1.astype(compute_dtype)
    b1c = b1.astype(compute_dtype)
    w2c = w2.astype(compute_dtype)

    tr = x_ref.shape[0]
    # Static unroll over the TR sub-rows: each iteration's big intermediate is
    # one (H, TC) block, consumed before the next iteration starts.
    for r in range(tr):
        xr = x_ref[r:r + 1, :].astype(compute_dtype)                # (1, TC)
        # Hidden layer: F.linear(x, w1, b1) with in_features == 1 is a
        # broadcast multiply; sigmoid(z) == 0.5*tanh(0.5*z) + 0.5 (single
        # EUP primitive instead of exp + divide).
        z = w1c * xr + b1c                                          # (H, TC)
        s = 0.5 * jnp.tanh(0.5 * z) + 0.5                           # (H, TC)
        # Output layer: h @ w2^T + b2  ==  sublane reduction over H
        # (VPU mul + XLU reduce, accumulated in f32).
        y = jnp.sum((w2c * s).astype(jnp.float32), axis=0, keepdims=True) + b2
        out_ref[r:r + 1, :] = y                                     # (1, TC) f32


def _pack_params(params, eps, H):
    """Pack the 12 tiny tensors into one (H, 16) f32 array -> one input DMA.
    Built with a single stack + pad (no per-field dynamic-update-slices)."""
    vec = lambda v: jnp.asarray(v, jnp.float32).reshape(-1)          # length H
    scal = lambda v: jnp.pad(vec(v), (0, H - 1))                     # scalar -> row 0
    cols = [
        vec(params["w1_mu"]), vec(params["w1_rho"]), vec(eps["w1"]),
        vec(params["b1_mu"]), vec(params["b1_rho"]), vec(eps["b1"]),
        vec(params["w2_mu"]), vec(params["w2_rho"]), vec(eps["w2"]),
        scal(params["b2_mu"]), scal(params["b2_rho"]), scal(eps["b2"]),
    ]
    packed = jnp.stack(cols, axis=1)                                 # (H, 12)
    return jnp.pad(packed, ((0, 0), (0, 4)))                         # (H, 16)


def _default_use_bf16():
    """bf16 VPU/EUP exists on v6e/v7x only; keep f32 on v5e and older."""
    try:
        kind = jax.devices()[0].device_kind.lower()
    except Exception:
        return False
    return ("v6" in kind) or ("v7" in kind)


@partial(jax.jit, static_argnames=("tr", "tc", "use_bf16"))
def _mlp_bbb_forward_impl(x, params, eps, tr, tc, use_bf16):
    N = x.shape[0]
    H = params["w1_mu"].shape[0]

    # Tile sizing: TR rows of TC lanes per grid step.
    tr = max(8, (int(tr) // 8) * 8)
    tc = max(128, min(int(tc), 2048))
    tc = (tc // 128) * 128
    # Shrink the lane width for small batches so a handful of points is not
    # padded out to tr*2048 slots.
    tc = min(tc, max(128, pl.cdiv(pl.cdiv(N, tr), 128) * 128))

    n_rows = pl.cdiv(N, tc)
    r_pad = pl.cdiv(n_rows, tr) * tr

    packed = _pack_params(params, eps, H)                            # (H, 16)

    # Batch as a sublane+lane dense (r_pad, tc) slab; zero padding is harmless
    # (padded outputs are sliced off below).
    x_slab = jnp.pad(jnp.asarray(x, jnp.float32).reshape(-1),
                     (0, r_pad * tc - N)).reshape(r_pad, tc)

    compute_dtype = jnp.bfloat16 if use_bf16 else jnp.float32
    kernel = partial(mlp_bbb_kernel, compute_dtype=compute_dtype)

    # TODO(synk): on v7x, verify "parallel" actually shards the batch grid
    # across both TensorCores; switch to pltpu.CORE_PARALLEL if the trace
    # shows a single core running.
    out_slab = pl.pallas_call(
        kernel,
        out_shape=jax.ShapeDtypeStruct((r_pad, tc), jnp.float32),
        grid_spec=pltpu.PrefetchScalarGridSpec(
            num_scalar_prefetch=0,
            grid=(r_pad // tr,),
            in_specs=[
                # Packed params: constant block index -> resident in VMEM.
                pl.BlockSpec((H, 16), lambda i: (0, 0)),
                # x tile: sublane- and lane-dense (tr, tc) block per step.
                pl.BlockSpec((tr, tc), lambda i: (i, 0)),
            ],
            out_specs=pl.BlockSpec((tr, tc), lambda i: (i, 0)),
        ),
        compiler_params=pltpu.CompilerParams(
            dimension_semantics=("parallel",),
        ),
    )(packed, x_slab)

    return out_slab.reshape(-1)[:N].reshape(N, 1)


def mlp_bbb_forward(x, params, eps, *, tr=8, tc=1024, use_bf16=None):
    """x: (N, 1). params/eps: dicts of arrays matching the torch module shapes."""
    if use_bf16 is None:
        use_bf16 = _default_use_bf16()
    return _mlp_bbb_forward_impl(x, params, eps, tr=int(tr), tc=int(tc),
                                 use_bf16=bool(use_bf16))


def mlp_bbb_reference(x, params, eps):
    """Pure-JAX reference mirroring the torch forward exactly."""
    w1 = params["w1_mu"] + jnp.log(1.0 + jnp.exp(params["w1_rho"])) * eps["w1"]   # (H, 1)
    b1 = params["b1_mu"] + jnp.log(1.0 + jnp.exp(params["b1_rho"])) * eps["b1"]   # (H,)
    h = jax.nn.sigmoid(x @ w1.T + b1[None, :])                                    # (N, H)
    w2 = params["w2_mu"] + jnp.log(1.0 + jnp.exp(params["w2_rho"])) * eps["w2"]   # (1, H)
    b2 = params["b2_mu"] + jnp.log(1.0 + jnp.exp(params["b2_rho"])) * eps["b2"]   # (1,)
    return h @ w2.T + b2[None, :]                                                 # (N, 1)


if __name__ == "__main__":
    N = 8           # batch of scalar input points (seq=8)
    H = 32          # hidden_units

    key = jax.random.PRNGKey(0)
    kx, kw1, kb1, kw2, kb2, kpm, kx2 = jax.random.split(key, 7)

    # Input points (like the 1-D regression inputs in BNN.py), shape (N, 1).
    x = jax.random.uniform(kx, (N, 1), jnp.float32, minval=-2.0, maxval=2.0)

    # Deterministic standard-normal epsilons (reparameterization trick noise).
    eps = {
        "w1": jax.random.normal(kw1, (H, 1), jnp.float32),
        "b1": jax.random.normal(kb1, (H,), jnp.float32),
        "w2": jax.random.normal(kw2, (1, H), jnp.float32),
        "b2": jax.random.normal(kb2, (1,), jnp.float32),
    }

    # Case 1: parameters as the torch module initializes them (all zeros).
    params_zero = {
        "w1_mu": jnp.zeros((H, 1), jnp.float32),
        "w1_rho": jnp.zeros((H, 1), jnp.float32),
        "b1_mu": jnp.zeros((H,), jnp.float32),
        "b1_rho": jnp.zeros((H,), jnp.float32),
        "w2_mu": jnp.zeros((1, H), jnp.float32),
        "w2_rho": jnp.zeros((1, H), jnp.float32),
        "b2_mu": jnp.zeros((1,), jnp.float32),
        "b2_rho": jnp.zeros((1,), jnp.float32),
    }

    # Case 2: random (trained-like) parameters — stronger check of the math.
    km = jax.random.split(kpm, 8)
    params_rand = {
        "w1_mu": 0.5 * jax.random.normal(km[0], (H, 1), jnp.float32),
        "w1_rho": 0.5 * jax.random.normal(km[1], (H, 1), jnp.float32),
        "b1_mu": 0.5 * jax.random.normal(km[2], (H,), jnp.float32),
        "b1_rho": 0.5 * jax.random.normal(km[3], (H,), jnp.float32),
        "w2_mu": 0.5 * jax.random.normal(km[4], (1, H), jnp.float32),
        "w2_rho": 0.5 * jax.random.normal(km[5], (1, H), jnp.float32),
        "b2_mu": 0.5 * jax.random.normal(km[6], (1,), jnp.float32),
        "b2_rho": 0.5 * jax.random.normal(km[7], (1,), jnp.float32),
    }

    for params in (params_zero, params_rand):
        ref = mlp_bbb_reference(x, params, eps)

        # Tight correctness check: f32 compute path (valid on every TPU gen).
        # Tolerance covers reduction-order + tanh-form-of-sigmoid differences.
        out = jax.block_until_ready(mlp_bbb_forward(x, params, eps, use_bf16=False))
        assert out.shape == (N, 1)
        assert jnp.allclose(out, ref, atol=1e-4, rtol=1e-4)

        # Fast path with the auto-detected inner dtype (bf16 on v6e/v7x,
        # f32 elsewhere) — loose sanity tolerance for the bf16 case.
        out_fast = jax.block_until_ready(mlp_bbb_forward(x, params, eps))
        assert out_fast.shape == (N, 1)
        assert bool(jnp.all(jnp.isfinite(out_fast)))
        assert jnp.allclose(out_fast, ref, atol=2e-1, rtol=1e-1)

    # Larger batch: exercises the multi-step grid, padding and dense 2-D tiling.
    N2 = 20000
    x2 = jax.random.uniform(kx2, (N2, 1), jnp.float32, minval=-2.0, maxval=2.0)
    out2 = jax.block_until_ready(mlp_bbb_forward(x2, params_rand, eps, use_bf16=False))
    ref2 = mlp_bbb_reference(x2, params_rand, eps)
    assert out2.shape == (N2, 1)
    assert jnp.allclose(out2, ref2, atol=1e-4, rtol=1e-4)

    # TODO(synk): log_prior / log_post / sample_elbo (Normal.log_prob sums) are
    # training-loss bookkeeping, not part of forward(); left to plain JAX.
    print("KERNEL_OK")
</pallas_src>

<mosaic_0001>
module attributes {stable_mosaic.version = 11 : i64} {
  func.func @mlp_bbb_kernel(%arg0: i32, %arg1: memref<32x16xf32, #tpu.memory_space<vmem>>, %arg2: memref<8x128xf32, #tpu.memory_space<vmem>>, %arg3: memref<8x128xf32, #tpu.memory_space<vmem>>) attributes {dimension_semantics = [#tpu.dimension_semantics<parallel>], iteration_bounds = array<i64: 1>, scalar_prefetch = 0 : i64, scratch_operands = 0 : i64, tpu.core_type = #tpu.core_type<tc>, window_params = [{pipeline_mode = #tpu.pipeline_mode<synchronous>, transform_indices = @transform_0, window_bounds = array<i64: 32, 16>}, {transform_indices = @transform_1, window_bounds = array<i64: 8, 128>}, {transform_indices = @transform_2, window_bounds = array<i64: 8, 128>}]} {
    %c0 = arith.constant 0 : index
    %c0_0 = arith.constant 0 : index
    %0 = vector.load %arg1[%c0, %c0_0] : memref<32x16xf32, #tpu.memory_space<vmem>>, vector<32x16xf32>
    %1 = vector.extract_strided_slice %0 {offsets = [0, 0], sizes = [32, 1], strides = [1, 1]} : vector<32x16xf32> to vector<32x1xf32>
    %2 = vector.extract_strided_slice %0 {offsets = [0, 1], sizes = [32, 1], strides = [1, 1]} : vector<32x16xf32> to vector<32x1xf32>
    %3 = math.exp %2 : vector<32x1xf32>
    %cst = arith.constant 1.000000e+00 : f32
    %4 = vector.broadcast %cst : f32 to vector<32x1xf32>
    %5 = arith.addf %4, %3 : vector<32x1xf32>
    %6 = math.log %5 : vector<32x1xf32>
    %7 = vector.extract_strided_slice %0 {offsets = [0, 2], sizes = [32, 1], strides = [1, 1]} : vector<32x16xf32> to vector<32x1xf32>
    %8 = arith.mulf %6, %7 : vector<32x1xf32>
    %9 = arith.addf %1, %8 : vector<32x1xf32>
    %10 = vector.extract_strided_slice %0 {offsets = [0, 3], sizes = [32, 1], strides = [1, 1]} : vector<32x16xf32> to vector<32x1xf32>
    %11 = vector.extract_strided_slice %0 {offsets = [0, 4], sizes = [32, 1], strides = [1, 1]} : vector<32x16xf32> to vector<32x1xf32>
    %12 = math.exp %11 : vector<32x1xf32>
    %cst_1 = arith.constant 1.000000e+00 : f32
    %13 = vector.broadcast %cst_1 : f32 to vector<32x1xf32>
    %14 = arith.addf %13, %12 : vector<32x1xf32>
    %15 = math.log %14 : vector<32x1xf32>
    %16 = vector.extract_strided_slice %0 {offsets = [0, 5], sizes = [32, 1], strides = [1, 1]} : vector<32x16xf32> to vector<32x1xf32>
    %17 = arith.mulf %15, %16 : vector<32x1xf32>
    %18 = arith.addf %10, %17 : vector<32x1xf32>
    %19 = vector.extract_strided_slice %0 {offsets = [0, 6], sizes = [32, 1], strides = [1, 1]} : vector<32x16xf32> to vector<32x1xf32>
    %20 = vector.extract_strided_slice %0 {offsets = [0, 7], sizes = [32, 1], strides = [1, 1]} : vector<32x16xf32> to vector<32x1xf32>
    %21 = math.exp %20 : vector<32x1xf32>
    %cst_2 = arith.constant 1.000000e+00 : f32
    %22 = vector.broadcast %cst_2 : f32 to vector<32x1xf32>
    %23 = arith.addf %22, %21 : vector<32x1xf32>
    %24 = math.log %23 : vector<32x1xf32>
    %25 = vector.extract_strided_slice %0 {offsets = [0, 8], sizes = [32, 1], strides = [1, 1]} : vector<32x16xf32> to vector<32x1xf32>
    %26 = arith.mulf %24, %25 : vector<32x1xf32>
    %27 = arith.addf %19, %26 : vector<32x1xf32>
    %28 = vector.extract_strided_slice %0 {offsets = [0, 9], sizes = [1, 1], strides = [1, 1]} : vector<32x16xf32> to vector<1x1xf32>
    %29 = vector.extract_strided_slice %0 {offsets = [0, 10], sizes = [1, 1], strides = [1, 1]} : vector<32x16xf32> to vector<1x1xf32>
    %30 = math.exp %29 : vector<1x1xf32>
    %cst_3 = arith.constant 1.000000e+00 : f32
    %31 = vector.broadcast %cst_3 : f32 to vector<1x1xf32>
    %32 = arith.addf %31, %30 : vector<1x1xf32>
    %33 = math.log %32 : vector<1x1xf32>
    %34 = vector.extract_strided_slice %0 {offsets = [0, 11], sizes = [1, 1], strides = [1, 1]} : vector<32x16xf32> to vector<1x1xf32>
    %35 = arith.mulf %33, %34 : vector<1x1xf32>
    %36 = arith.addf %28, %35 : vector<1x1xf32>
    %c0_4 = arith.constant 0 : index
    %c0_5 = arith.constant 0 : index
    %37 = vector.load %arg2[%c0_4, %c0_5] : memref<8x128xf32, #tpu.memory_space<vmem>>, vector<1x128xf32>
    %38 = vector.broadcast %9 : vector<32x1xf32> to vector<32x128xf32>
    %39 = vector.broadcast %37 : vector<1x128xf32> to vector<32x128xf32>
    %40 = arith.mulf %38, %39 : vector<32x128xf32>
    %41 = vector.broadcast %18 : vector<32x1xf32> to vector<32x128xf32>
    %42 = arith.addf %40, %41 : vector<32x128xf32>
    %cst_6 = arith.constant 5.000000e-01 : f32
    %43 = vector.broadcast %cst_6 : f32 to vector<32x128xf32>
    %44 = arith.mulf %43, %42 : vector<32x128xf32>
    %45 = math.tanh %44 : vector<32x128xf32>
    %cst_7 = arith.constant 5.000000e-01 : f32
    %46 = vector.broadcast %cst_7 : f32 to vector<32x128xf32>
    %47 = arith.mulf %46, %45 : vector<32x128xf32>
    %cst_8 = arith.constant 5.000000e-01 : f32
    %48 = vector.broadcast %cst_8 : f32 to vector<32x128xf32>
    %49 = arith.addf %47, %48 : vector<32x128xf32>
    %50 = vector.broadcast %27 : vector<32x1xf32> to vector<32x128xf32>
    %51 = arith.mulf %50, %49 : vector<32x128xf32>
    %cst_9 = arith.constant dense<0.000000e+00> : vector<128xf32>
    %52 = vector.multi_reduction <add>, %51, %cst_9 [0] : vector<32x128xf32> to vector<128xf32>
    %53 = vector.shape_cast %52 : vector<128xf32> to vector<1x128xf32>
    %54 = vector.broadcast %36 : vector<1x1xf32> to vector<1x128xf32>
    %55 = arith.addf %53, %54 : vector<1x128xf32>
    %c0_10 = arith.constant 0 : index
    %c0_11 = arith.constant 0 : index
    %56 = vector.load %arg3[%c0_10, %c0_11] : memref<8x128xf32, #tpu.memory_space<vmem>>, vector<1x128xf32>
    tpu.vector_store %arg3[%c0_10, %c0_11], %55 {strides = array<i32>} : memref<8x128xf32, #tpu.memory_space<vmem>>, vector<1x128xf32>,
    %c1 = arith.constant 1 : index
    %c0_12 = arith.constant 0 : index
    %57 = vector.load %arg2[%c1, %c0_12] : memref<8x128xf32, #tpu.memory_space<vmem>>, vector<1x128xf32>
    %58 = vector.broadcast %9 : vector<32x1xf32> to vector<32x128xf32>
    %59 = vector.broadcast %57 : vector<1x128xf32> to vector<32x128xf32>
    %60 = arith.mulf %58, %59 : vector<32x128xf32>
    %61 = vector.broadcast %18 : vector<32x1xf32> to vector<32x128xf32>
    %62 = arith.addf %60, %61 : vector<32x128xf32>
    %cst_13 = arith.constant 5.000000e-01 : f32
    %63 = vector.broadcast %cst_13 : f32 to vector<32x128xf32>
    %64 = arith.mulf %63, %62 : vector<32x128xf32>
    %65 = math.tanh %64 : vector<32x128xf32>
    %cst_14 = arith.constant 5.000000e-01 : f32
    %66 = vector.broadcast %cst_14 : f32 to vector<32x128xf32>
    %67 = arith.mulf %66, %65 : vector<32x128xf32>
    %cst_15 = arith.constant 5.000000e-01 : f32
    %68 = vector.broadcast %cst_15 : f32 to vector<32x128xf32>
    %69 = arith.addf %67, %68 : vector<32x128xf32>
    %70 = vector.broadcast %27 : vector<32x1xf32> to vector<32x128xf32>
    %71 = arith.mulf %70, %69 : vector<32x128xf32>
    %cst_16 = arith.constant dense<0.000000e+00> : vector<128xf32>
    %72 = vector.multi_reduction <add>, %71, %cst_16 [0] : vector<32x128xf32> to vector<128xf32>
    %73 = vector.shape_cast %72 : vector<128xf32> to vector<1x128xf32>
    %74 = vector.broadcast %36 : vector<1x1xf32> to vector<1x128xf32>
    %75 = arith.addf %73, %74 : vector<1x128xf32>
    %c1_17 = arith.constant 1 : index
    %c0_18 = arith.constant 0 : index
    %76 = vector.load %arg3[%c1_17, %c0_18] : memref<8x128xf32, #tpu.memory_space<vmem>>, vector<1x128xf32>
    tpu.vector_store %arg3[%c1_17, %c0_18], %75 {strides = array<i32>} : memref<8x128xf32, #tpu.memory_space<vmem>>, vector<1x128xf32>,
    %c2 = arith.constant 2 : index
    %c0_19 = arith.constant 0 : index
    %77 = vector.load %arg2[%c2, %c0_19] : memref<8x128xf32, #tpu.memory_space<vmem>>, vector<1x128xf32>
    %78 = vector.broadcast %9 : vector<32x1xf32> to vector<32x128xf32>
    %79 = vector.broadcast %77 : vector<1x128xf32> to vector<32x128xf32>
    %80 = arith.mulf %78, %79 : vector<32x128xf32>
    %81 = vector.broadcast %18 : vector<32x1xf32> to vector<32x128xf32>
    %82 = arith.addf %80, %81 : vector<32x128xf32>
    %cst_20 = arith.constant 5.000000e-01 : f32
    %83 = vector.broadcast %cst_20 : f32 to vector<32x128xf32>
    %84 = arith.mulf %83, %82 : vector<32x128xf32>
    %85 = math.tanh %84 : vector<32x128xf32>
    %cst_21 = arith.constant 5.000000e-01 : f32
    %86 = vector.broadcast %cst_21 : f32 to vector<32x128xf32>
    %87 = arith.mulf %86, %85 : vector<32x128xf32>
    %cst_22 = arith.constant 5.000000e-01 : f32
    %88 = vector.broadcast %cst_22 : f32 to vector<32x128xf32>
    %89 = arith.addf %87, %88 : vector<32x128xf32>
    %90 = vector.broadcast %27 : vector<32x1xf32> to vector<32x128xf32>
    %91 = arith.mulf %90, %89 : vector<32x128xf32>
    %cst_23 = arith.constant dense<0.000000e+00> : vector<128xf32>
    %92 = vector.multi_reduction <add>, %91, %cst_23 [0] : vector<32x128xf32> to vector<128xf32>
    %93 = vector.shape_cast %92 : vector<128xf32> to vector<1x128xf32>
    %94 = vector.broadcast %36 : vector<1x1xf32> to vector<1x128xf32>
    %95 = arith.addf %93, %94 : vector<1x128xf32>
    %c2_24 = arith.constant 2 : index
    %c0_25 = arith.constant 0 : index
    %96 = vector.load %arg3[%c2_24, %c0_25] : memref<8x128xf32, #tpu.memory_space<vmem>>, vector<1x128xf32>
    tpu.vector_store %arg3[%c2_24, %c0_25], %95 {strides = array<i32>} : memref<8x128xf32, #tpu.memory_space<vmem>>, vector<1x128xf32>,
    %c3 = arith.constant 3 : index
    %c0_26 = arith.constant 0 : index
    %97 = vector.load %arg2[%c3, %c0_26] : memref<8x128xf32, #tpu.memory_space<vmem>>, vector<1x128xf32>
    %98 = vector.broadcast %9 : vector<32x1xf32> to vector<32x128xf32>
    %99 = vector.broadcast %97 : vector<1x128xf32> to vector<32x128xf32>
    %100 = arith.mulf %98, %99 : vector<32x128xf32>
    %101 = vector.broadcast %18 : vector<32x1xf32> to vector<32x128xf32>
    %102 = arith.addf %100, %101 : vector<32x128xf32>
    %cst_27 = arith.constant 5.000000e-01 : f32
    %103 = vector.broadcast %cst_27 : f32 to vector<32x128xf32>
    %104 = arith.mulf %103, %102 : vector<32x128xf32>
    %105 = math.tanh %104 : vector<32x128xf32>
    %cst_28 = arith.constant 5.000000e-01 : f32
    %106 = vector.broadcast %cst_28 : f32 to vector<32x128xf32>
    %107 = arith.mulf %106, %105 : vector<32x128xf32>
    %cst_29 = arith.constant 5.000000e-01 : f32
    %108 = vector.broadcast %cst_29 : f32 to vector<32x128xf32>
    %109 = arith.addf %107, %108 : vector<32x128xf32>
    %110 = vector.broadcast %27 : vector<32x1xf32> to vector<32x128xf32>
    %111 = arith.mulf %110, %109 : vector<32x128xf32>
    %cst_30 = arith.constant dense<0.000000e+00> : vector<128xf32>
    %112 = vector.multi_reduction <add>, %111, %cst_30 [0] : vector<32x128xf32> to vector<128xf32>
    %113 = vector.shape_cast %112 : vector<128xf32> to vector<1x128xf32>
    %114 = vector.broadcast %36 : vector<1x1xf32> to vector<1x128xf32>
    %115 = arith.addf %113, %114 : vector<1x128xf32>
    %c3_31 = arith.constant 3 : index
    %c0_32 = arith.constant 0 : index
    %116 = vector.load %arg3[%c3_31, %c0_32] : memref<8x128xf32, #tpu.memory_space<vmem>>, vector<1x128xf32>
    tpu.vector_store %arg3[%c3_31, %c0_32], %115 {strides = array<i32>} : memref<8x128xf32, #tpu.memory_space<vmem>>, vector<1x128xf32>,
    %c4 = arith.constant 4 : index
    %c0_33 = arith.constant 0 : index
    %117 = vector.load %arg2[%c4, %c0_33] : memref<8x128xf32, #tpu.memory_space<vmem>>, vector<1x128xf32>
    %118 = vector.broadcast %9 : vector<32x1xf32> to vector<32x128xf32>
    %119 = vector.broadcast %117 : vector<1x128xf32> to vector<32x128xf32>
    %120 = arith.mulf %118, %119 : vector<32x128xf32>
    %121 = vector.broadcast %18 : vector<32x1xf32> to vector<32x128xf32>
    %122 = arith.addf %120, %121 : vector<32x128xf32>
    %cst_34 = arith.constant 5.000000e-01 : f32
    %123 = vector.broadcast %cst_34 : f32 to vector<32x128xf32>
    %124 = arith.mulf %123, %122 : vector<32x128xf32>
    %125 = math.tanh %124 : vector<32x128xf32>
    %cst_35 = arith.constant 5.000000e-01 : f32
    %126 = vector.broadcast %cst_35 : f32 to vector<32x128xf32>
    %127 = arith.mulf %126, %125 : vector<32x128xf32>
    %cst_36 = arith.constant 5.000000e-01 : f32
    %128 = vector.broadcast %cst_36 : f32 to vector<32x128xf32>
    %129 = arith.addf %127, %128 : vector<32x128xf32>
    %130 = vector.broadcast %27 : vector<32x1xf32> to vector<32x128xf32>
    %131 = arith.mulf %130, %129 : vector<32x128xf32>
    %cst_37 = arith.constant dense<0.000000e+00> : vector<128xf32>
    %132 = vector.multi_reduction <add>, %131, %cst_37 [0] : vector<32x128xf32> to vector<128xf32>
    %133 = vector.shape_cast %132 : vector<128xf32> to vector<1x128xf32>
    %134 = vector.broadcast %36 : vector<1x1xf32> to vector<1x128xf32>
    %135 = arith.addf %133, %134 : vector<1x128xf32>
    %c4_38 = arith.constant 4 : index
    %c0_39 = arith.constant 0 : index
    %136 = vector.load %arg3[%c4_38, %c0_39] : memref<8x128xf32, #tpu.memory_space<vmem>>, vector<1x128xf32>
    tpu.vector_store %arg3[%c4_38, %c0_39], %135 {strides = array<i32>} : memref<8x128xf32, #tpu.memory_space<vmem>>, vector<1x128xf32>,
    %c5 = arith.constant 5 : index
    %c0_40 = arith.constant 0 : index
    %137 = vector.load %arg2[%c5, %c0_40] : memref<8x128xf32, #tpu.memory_space<vmem>>, vector<1x128xf32>
    %138 = vector.broadcast %9 : vector<32x1xf32> to vector<32x128xf32>
    %139 = vector.broadcast %137 : vector<1x128xf32> to vector<32x128xf32>
    %140 = arith.mulf %138, %139 : vector<32x128xf32>
    %141 = vector.broadcast %18 : vector<32x1xf32> to vector<32x128xf32>
    %142 = arith.addf %140, %141 : vector<32x128xf32>
    %cst_41 = arith.constant 5.000000e-01 : f32
    %143 = vector.broadcast %cst_41 : f32 to vector<32x128xf32>
    %144 = arith.mulf %143, %142 : vector<32x128xf32>
    %145 = math.tanh %144 : vector<32x128xf32>
    %cst_42 = arith.constant 5.000000e-01 : f32
    %146 = vector.broadcast %cst_42 : f32 to vector<32x128xf32>
    %147 = arith.mulf %146, %145 : vector<32x128xf32>
    %cst_43 = arith.constant 5.000000e-01 : f32
    %148 = vector.broadcast %cst_43 : f32 to vector<32x128xf32>
    %149 = arith.addf %147, %148 : vector<32x128xf32>
    %150 = vector.broadcast %27 : vector<32x1xf32> to vector<32x128xf32>
    %151 = arith.mulf %150, %149 : vector<32x128xf32>
    %cst_44 = arith.constant dense<0.000000e+00> : vector<128xf32>
    %152 = vector.multi_reduction <add>, %151, %cst_44 [0] : vector<32x128xf32> to vector<128xf32>
    %153 = vector.shape_cast %152 : vector<128xf32> to vector<1x128xf32>
    %154 = vector.broadcast %36 : vector<1x1xf32> to vector<1x128xf32>
    %155 = arith.addf %153, %154 : vector<1x128xf32>
    %c5_45 = arith.constant 5 : index
    %c0_46 = arith.constant 0 : index
    %156 = vector.load %arg3[%c5_45, %c0_46] : memref<8x128xf32, #tpu.memory_space<vmem>>, vector<1x128xf32>
    tpu.vector_store %arg3[%c5_45, %c0_46], %155 {strides = array<i32>} : memref<8x128xf32, #tpu.memory_space<vmem>>, vector<1x128xf32>,
    %c6 = arith.constant 6 : index
    %c0_47 = arith.constant 0 : index
    %157 = vector.load %arg2[%c6, %c0_47] : memref<8x128xf32, #tpu.memory_space<vmem>>, vector<1x128xf32>
    %158 = vector.broadcast %9 : vector<32x1xf32> to vector<32x128xf32>
    %159 = vector.broadcast %157 : vector<1x128xf32> to vector<32x128xf32>
    %160 = arith.mulf %158, %159 : vector<32x128xf32>
    %161 = vector.broadcast %18 : vector<32x1xf32> to vector<32x128xf32>
    %162 = arith.addf %160, %161 : vector<32x128xf32>
    %cst_48 = arith.constant 5.000000e-01 : f32
    %163 = vector.broadcast %cst_48 : f32 to vector<32x128xf32>
    %164 = arith.mulf %163, %162 : vector<32x128xf32>
    %165 = math.tanh %164 : vector<32x128xf32>
    %cst_49 = arith.constant 5.000000e-01 : f32
    %166 = vector.broadcast %cst_49 : f32 to vector<32x128xf32>
    %167 = arith.mulf %166, %165 : vector<32x128xf32>
    %cst_50 = arith.constant 5.000000e-01 : f32
    %168 = vector.broadcast %cst_50 : f32 to vector<32x128xf32>
    %169 = arith.addf %167, %168 : vector<32x128xf32>
    %170 = vector.broadcast %27 : vector<32x1xf32> to vector<32x128xf32>
    %171 = arith.mulf %170, %169 : vector<32x128xf32>
    %cst_51 = arith.constant dense<0.000000e+00> : vector<128xf32>
    %172 = vector.multi_reduction <add>, %171, %cst_51 [0] : vector<32x128xf32> to vector<128xf32>
    %173 = vector.shape_cast %172 : vector<128xf32> to vector<1x128xf32>
    %174 = vector.broadcast %36 : vector<1x1xf32> to vector<1x128xf32>
    %175 = arith.addf %173, %174 : vector<1x128xf32>
    %c6_52 = arith.constant 6 : index
    %c0_53 = arith.constant 0 : index
    %176 = vector.load %arg3[%c6_52, %c0_53] : memref<8x128xf32, #tpu.memory_space<vmem>>, vector<1x128xf32>
    tpu.vector_store %arg3[%c6_52, %c0_53], %175 {strides = array<i32>} : memref<8x128xf32, #tpu.memory_space<vmem>>, vector<1x128xf32>,
    %c7 = arith.constant 7 : index
    %c0_54 = arith.constant 0 : index
    %177 = vector.load %arg2[%c7, %c0_54] : memref<8x128xf32, #tpu.memory_space<vmem>>, vector<1x128xf32>
    %178 = vector.broadcast %9 : vector<32x1xf32> to vector<32x128xf32>
    %179 = vector.broadcast %177 : vector<1x128xf32> to vector<32x128xf32>
    %180 = arith.mulf %178, %179 : vector<32x128xf32>
    %181 = vector.broadcast %18 : vector<32x1xf32> to vector<32x128xf32>
    %182 = arith.addf %180, %181 : vector<32x128xf32>
    %cst_55 = arith.constant 5.000000e-01 : f32
    %183 = vector.broadcast %cst_55 : f32 to vector<32x128xf32>
    %184 = arith.mulf %183, %182 : vector<32x128xf32>
    %185 = math.tanh %184 : vector<32x128xf32>
    %cst_56 = arith.constant 5.000000e-01 : f32
    %186 = vector.broadcast %cst_56 : f32 to vector<32x128xf32>
    %187 = arith.mulf %186, %185 : vector<32x128xf32>
    %cst_57 = arith.constant 5.000000e-01 : f32
    %188 = vector.broadcast %cst_57 : f32 to vector<32x128xf32>
    %189 = arith.addf %187, %188 : vector<32x128xf32>
    %190 = vector.broadcast %27 : vector<32x1xf32> to vector<32x128xf32>
    %191 = arith.mulf %190, %189 : vector<32x128xf32>
    %cst_58 = arith.constant dense<0.000000e+00> : vector<128xf32>
    %192 = vector.multi_reduction <add>, %191, %cst_58 [0] : vector<32x128xf32> to vector<128xf32>
    %193 = vector.shape_cast %192 : vector<128xf32> to vector<1x128xf32>
    %194 = vector.broadcast %36 : vector<1x1xf32> to vector<1x128xf32>
    %195 = arith.addf %193, %194 : vector<1x128xf32>
    %c7_59 = arith.constant 7 : index
    %c0_60 = arith.constant 0 : index
    %196 = vector.load %arg3[%c7_59, %c0_60] : memref<8x128xf32, #tpu.memory_space<vmem>>, vector<1x128xf32>
    tpu.vector_store %arg3[%c7_59, %c0_60], %195 {strides = array<i32>} : memref<8x128xf32, #tpu.memory_space<vmem>>, vector<1x128xf32>,
    return
  }
  func.func @transform_0(%arg0: i32) -> (i32, i32) {
    %c0_i32 = arith.constant 0 : i32
    %c0_i32_0 = arith.constant 0 : i32
    %c0_i32_1 = arith.constant 0 : i32
    return %c0_i32, %c0_i32_0 : i32, i32
  }
  func.func @transform_1(%arg0: i32) -> (i32, i32) {
    %c0_i32 = arith.constant 0 : i32
    %c0_i32_0 = arith.constant 0 : i32
    return %arg0, %c0_i32 : i32, i32
  }
  func.func @transform_2(%arg0: i32) -> (i32, i32) {
    %c0_i32 = arith.constant 0 : i32
    %c0_i32_0 = arith.constant 0 : i32
    return %arg0, %c0_i32 : i32, i32
  }
}

</mosaic_0001>

<llo_original>
// kernel: _mlp_bbb_forward_impl.1
$region0: #{_mlp_bbb_forward_impl.1}
  #allocation0 [shape = 'u32[]', space=smem, size = 0x4, offset = 0x4, fixed_abs, tag = 'smem constant byte address 0x4 - core index']
  #allocation1 [shape = 'u32[144,128]{1,0:T(1,128)}', space=vmem, size = 0x12000, scoped, tag = 'internal scratch']
  %s0 = inlined_call_operand.vmem [shape: f32[32,16], index: 0, kind: input, shape index: {}]
  %s1 = inlined_call_operand.vmem [shape: f32[8,128], index: 1, kind: input, shape index: {}]
  %s2 = inlined_call_operand.vmem [shape: f32[8,128], index: 2, kind: output, shape index: {}]
  %s3 = sld [smem:[#allocation0]]
  $region18: #{_mlp_bbb_forward_impl.1} parent=0
    _
  %s5 = ssub.s32 1, %s3
  %s6 = scalar_select 0, %s5, %s3
  // Predicated region
  $region2: #{_mlp_bbb_forward_impl.1} parent=0 // pred_check
    _
  $region3: #{_mlp_bbb_forward_impl.1} parent=0 // pred_check_branch
    %8 = sbr.rel (0) target = $region5
  $region4: #{_mlp_bbb_forward_impl.1} parent=0 // pred_region
    _
  $region5: #{_mlp_bbb_forward_impl.1} parent=0 // pred_fallthru
    _
  // Predicated region
  $region6: #{_mlp_bbb_forward_impl.1} parent=0 // pred_check
    _
  $region7: #{_mlp_bbb_forward_impl.1} parent=0 // pred_check_branch
    %10 = sbr.rel (0) target = $region9
  $region8: #{_mlp_bbb_forward_impl.1} parent=0 // pred_region
    _
  $region9: #{_mlp_bbb_forward_impl.1} parent=0 // pred_fallthru
    _
  %v11 = vld [vmem:[%s0] sm:$0xff]
  %v12 = vld [vmem:[%s0 + $0x8] sm:$0xff]
  %v13 = vld [vmem:[%s0 + $0x10] sm:$0xff]
  %v14 = vld [vmem:[%s0 + $0x18] sm:$0xff]
  %v15 = vmul.f32 %v11, 1.442695
  %v16 = vpow.pop %v15
  %v17 = vmul.f32 %v12, 1.442695
  %v18 = vpow.pop %v17
  %v19 = vmul.f32 %v13, 1.442695
  %v20 = vpow.pop %v19
  %v21 = vmul.f32 %v14, 1.442695
  %v22 = vpow.pop %v21
  %v23 = vadd.f32 %v16, 1.0
  %v24 = vadd.f32 %v18, 1.0
  %v25 = vadd.f32 %v20, 1.0
  %v26 = vadd.f32 %v22, 1.0
  %v27 = vlog2.pop %v23
  %v28 = vmul.f32 %v27, 0.6931472
  %v29 = vlog2.pop %v24
  %v30 = vmul.f32 %v29, 0.6931472
  %v31 = vlog2.pop %v25
  %v32 = vmul.f32 %v31, 0.6931472
  %v33 = vlog2.pop %v26
  %v34 = vmul.f32 %v33, 0.6931472
  %39 = vrot.lane.b32.xlu0 %v11, 127
  %v40 = vpop.permute.xlu0 %39
  %41 = vrot.lane.b32.xlu0 %v12, 127
  %v42 = vpop.permute.xlu0 %41
  %43 = vrot.lane.b32.xlu0 %v13, 127
  %v44 = vpop.permute.xlu0 %43
  %45 = vrot.lane.b32.xlu0 %v14, 127
  %v46 = vpop.permute.xlu0 %45
  %v51 = vmul.f32 %v28, %v40
  %v52 = vmul.f32 %v30, %v42
  %v53 = vmul.f32 %v32, %v44
  %v54 = vmul.f32 %v34, %v46
  %59 = vrot.lane.b32.xlu0 %v51, 127
  %v60 = vpop.permute.xlu0 %59
  %61 = vrot.lane.b32.xlu0 %v52, 127
  %v62 = vpop.permute.xlu0 %61
  %63 = vrot.lane.b32.xlu0 %v53, 127
  %v64 = vpop.permute.xlu0 %63
  %65 = vrot.lane.b32.xlu0 %v54, 127
  %v66 = vpop.permute.xlu0 %65
  %v71 = vadd.f32 %v11, %v60
  %v72 = vadd.f32 %v12, %v62
  %v73 = vadd.f32 %v13, %v64
  %v74 = vadd.f32 %v14, %v66
  %v75 = vld [vmem:[%s1] sm:$0x1]
  %77 = vset.pattern.permute.xlu0 0
  %78 = vperm.xlu0 %77, %v71
  %v79 = vpop.permute.xlu0 %78
  %82 = vset.pattern.permute.xlu0 0
  %83 = vperm.xlu0 %82, %v72
  %v84 = vpop.permute.xlu0 %83
  %87 = vset.pattern.permute.xlu0 0
  %88 = vperm.xlu0 %87, %v73
  %v89 = vpop.permute.xlu0 %88
  %92 = vset.pattern.permute.xlu0 0
  %93 = vperm.xlu0 %92, %v74
  %v94 = vpop.permute.xlu0 %93
  %v96 = vlaneseq
  %v97 = vshrl.u32 %v96, 7
  %v98 = vsub.s32 0, %v97
  %v99 = vrot.slane %v75, %v98
  %v100 = vmul.f32 %v79, %v99
  %v101 = vmul.f32 %v84, %v99
  %v102 = vmul.f32 %v89, %v99
  %v103 = vmul.f32 %v94, %v99
  %104 = vset.pattern.permute.xlu0 3
  %105 = vperm.xlu0 %104, %v71
  %v106 = vpop.permute.xlu0 %105
  %108 = vset.pattern.permute.xlu0 3
  %109 = vperm.xlu0 %108, %v72
  %v110 = vpop.permute.xlu0 %109
  %112 = vset.pattern.permute.xlu0 3
  %113 = vperm.xlu0 %112, %v73
  %v114 = vpop.permute.xlu0 %113
  %116 = vset.pattern.permute.xlu0 3
  %117 = vperm.xlu0 %116, %v74
  %v118 = vpop.permute.xlu0 %117
  %v120 = vadd.f32 %v100, %v106
  %v121 = vadd.f32 %v101, %v110
  %v122 = vadd.f32 %v102, %v114
  %v123 = vadd.f32 %v103, %v118
  %v124 = vmul.f32 %v120, 0.5
  %v125 = vmul.f32 %v121, 0.5
  %v126 = vmul.f32 %v122, 0.5
  %v127 = vmul.f32 %v123, 0.5
  %v128 = vtanh.pop %v124
  %v129 = vtanh.pop %v125
  %v130 = vtanh.pop %v126
  %v131 = vtanh.pop %v127
  %v132 = vmul.f32 %v128, 0.5
  %v133 = vmul.f32 %v129, 0.5
  %v134 = vmul.f32 %v130, 0.5
  %v135 = vmul.f32 %v131, 0.5
  %v136 = vadd.f32 %v132, 0.5
  %v137 = vadd.f32 %v133, 0.5
  %v138 = vadd.f32 %v134, 0.5
  %v139 = vadd.f32 %v135, 0.5
  %140 = vset.pattern.permute.xlu0 6
  %141 = vperm.xlu0 %140, %v71
  %v142 = vpop.permute.xlu0 %141
  %144 = vset.pattern.permute.xlu0 6
  %145 = vperm.xlu0 %144, %v72
  %v146 = vpop.permute.xlu0 %145
  %148 = vset.pattern.permute.xlu0 6
  %149 = vperm.xlu0 %148, %v73
  %v150 = vpop.permute.xlu0 %149
  %152 = vset.pattern.permute.xlu0 6
  %153 = vperm.xlu0 %152, %v74
  %v154 = vpop.permute.xlu0 %153
  %v156 = vmul.f32 %v142, %v136
  %v157 = vmul.f32 %v146, %v137
  %v158 = vmul.f32 %v150, %v138
  %v159 = vmul.f32 %v154, %v139
  %v160 = vadd.f32 %v156, %v157
  %v161 = vadd.f32 %v160, %v158
  %v162 = vadd.f32 %v161, %v159
  %v163 = vrot.slane %v162, 4
  %v164 = vadd.f32 %v162, %v163
  %v165 = vrot.slane %v164, 2
  %v166 = vadd.f32 %v164, %v165
  %v167 = vrot.slane %v166, 1
  %v168 = vadd.f32 %v166, %v167
  %169 = vset.pattern.permute.xlu0 9
  %170 = vperm.xlu0 %169, %v71
  %v171 = vpop.permute.xlu0 %170
  %v173 = vadd.f32 %v168, %v171
  %174 = vst [vmem:[%s2] sm:$0x1] %v173
  %v175 = vld [vmem:[%s1 + $0x1] sm:$0x1]
  %v176 = vlaneseq
  %v177 = vshrl.u32 %v176, 7
  %v178 = vsub.s32 0, %v177
  %v179 = vrot.slane %v175, %v178
  %v180 = vmul.f32 %v79, %v179
  %v181 = vmul.f32 %v84, %v179
  %v182 = vmul.f32 %v89, %v179
  %v183 = vmul.f32 %v94, %v179
  %v184 = vadd.f32 %v180, %v106
  %v185 = vadd.f32 %v181, %v110
  %v186 = vadd.f32 %v182, %v114
  %v187 = vadd.f32 %v183, %v118
  %v188 = vmul.f32 %v184, 0.5
  %v189 = vmul.f32 %v185, 0.5
  %v190 = vmul.f32 %v186, 0.5
  %v191 = vmul.f32 %v187, 0.5
  %v192 = vtanh.pop %v188
  %v193 = vtanh.pop %v189
  %v194 = vtanh.pop %v190
  %v195 = vtanh.pop %v191
  %v196 = vmul.f32 %v192, 0.5
  %v197 = vmul.f32 %v193, 0.5
  %v198 = vmul.f32 %v194, 0.5
  %v199 = vmul.f32 %v195, 0.5
  %v200 = vadd.f32 %v196, 0.5
  %v201 = vadd.f32 %v197, 0.5
  %v202 = vadd.f32 %v198, 0.5
  %v203 = vadd.f32 %v199, 0.5
  %v204 = vmul.f32 %v142, %v200
  %v205 = vmul.f32 %v146, %v201
  %v206 = vmul.f32 %v150, %v202
  %v207 = vmul.f32 %v154, %v203
  %v208 = vadd.f32 %v204, %v205
  %v209 = vadd.f32 %v208, %v206
  %v210 = vadd.f32 %v209, %v207
  %v211 = vrot.slane %v210, 4
  %v212 = vadd.f32 %v210, %v211
  %v213 = vrot.slane %v212, 2
  %v214 = vadd.f32 %v212, %v213
  %v215 = vrot.slane %v214, 1
  %v216 = vadd.f32 %v214, %v215
  %v217 = vadd.f32 %v216, %v171
  %218 = vst [vmem:[%s2 + $0x1] sm:$0x1] %v217
  %v219 = vld [vmem:[%s1 + $0x2] sm:$0x1]
  %v220 = vlaneseq
  %v221 = vshrl.u32 %v220, 7
  %v222 = vsub.s32 0, %v221
  %v223 = vrot.slane %v219, %v222
  %v224 = vmul.f32 %v79, %v223
  %v225 = vmul.f32 %v84, %v223
  %v226 = vmul.f32 %v89, %v223
  %v227 = vmul.f32 %v94, %v223
  %v228 = vadd.f32 %v224, %v106
  %v229 = vadd.f32 %v225, %v110
  %v230 = vadd.f32 %v226, %v114
  %v231 = vadd.f32 %v227, %v118
  %v232 = vmul.f32 %v228, 0.5
  %v233 = vmul.f32 %v229, 0.5
  %v234 = vmul.f32 %v230, 0.5
  %v235 = vmul.f32 %v231, 0.5
  %v236 = vtanh.pop %v232
  %v237 = vtanh.pop %v233
  %v238 = vtanh.pop %v234
  %v239 = vtanh.pop %v235
  %v240 = vmul.f32 %v236, 0.5
  %v241 = vmul.f32 %v237, 0.5
  %v242 = vmul.f32 %v238, 0.5
  %v243 = vmul.f32 %v239, 0.5
  %v244 = vadd.f32 %v240, 0.5
  %v245 = vadd.f32 %v241, 0.5
  %v246 = vadd.f32 %v242, 0.5
  %v247 = vadd.f32 %v243, 0.5
  %v248 = vmul.f32 %v142, %v244
  %v249 = vmul.f32 %v146, %v245
  %v250 = vmul.f32 %v150, %v246
  %v251 = vmul.f32 %v154, %v247
  %v252 = vadd.f32 %v248, %v249
  %v253 = vadd.f32 %v252, %v250
  %v254 = vadd.f32 %v253, %v251
  %v255 = vrot.slane %v254, 4
  %v256 = vadd.f32 %v254, %v255
  %v257 = vrot.slane %v256, 2
  %v258 = vadd.f32 %v256, %v257
  %v259 = vrot.slane %v258, 1
  %v260 = vadd.f32 %v258, %v259
  %v261 = vadd.f32 %v260, %v171
  %262 = vst [vmem:[%s2 + $0x2] sm:$0x1] %v261
  %v263 = vld [vmem:[%s1 + $0x3] sm:$0x1]
  %v264 = vlaneseq
  %v265 = vshrl.u32 %v264, 7
  %v266 = vsub.s32 0, %v265
  %v267 = vrot.slane %v263, %v266
  %v268 = vmul.f32 %v79, %v267
  %v269 = vmul.f32 %v84, %v267
  %v270 = vmul.f32 %v89, %v267
  %v271 = vmul.f32 %v94, %v267
  %v272 = vadd.f32 %v268, %v106
  %v273 = vadd.f32 %v269, %v110
  %v274 = vadd.f32 %v270, %v114
  %v275 = vadd.f32 %v271, %v118
  %v276 = vmul.f32 %v272, 0.5
  %v277 = vmul.f32 %v273, 0.5
  %v278 = vmul.f32 %v274, 0.5
  %v279 = vmul.f32 %v275, 0.5
  %v280 = vtanh.pop %v276
  %v281 = vtanh.pop %v277
  %v282 = vtanh.pop %v278
  %v283 = vtanh.pop %v279
  %v284 = vmul.f32 %v280, 0.5
  %v285 = vmul.f32 %v281, 0.5
  %v286 = vmul.f32 %v282, 0.5
  %v287 = vmul.f32 %v283, 0.5
  %v288 = vadd.f32 %v284, 0.5
  %v289 = vadd.f32 %v285, 0.5
  %v290 = vadd.f32 %v286, 0.5
  %v291 = vadd.f32 %v287, 0.5
  %v292 = vmul.f32 %v142, %v288
  %v293 = vmul.f32 %v146, %v289
  %v294 = vmul.f32 %v150, %v290
  %v295 = vmul.f32 %v154, %v291
  %v296 = vadd.f32 %v292, %v293
  %v297 = vadd.f32 %v296, %v294
  %v298 = vadd.f32 %v297, %v295
  %v299 = vrot.slane %v298, 4
  %v300 = vadd.f32 %v298, %v299
  %v301 = vrot.slane %v300, 2
  %v302 = vadd.f32 %v300, %v301
  %v303 = vrot.slane %v302, 1
  %v304 = vadd.f32 %v302, %v303
  %v305 = vadd.f32 %v304, %v171
  %306 = vst [vmem:[%s2 + $0x3] sm:$0x1] %v305
  %v307 = vld [vmem:[%s1 + $0x4] sm:$0x1]
  %v308 = vlaneseq
  %v309 = vshrl.u32 %v308, 7
  %v310 = vsub.s32 0, %v309
  %v311 = vrot.slane %v307, %v310
  %v312 = vmul.f32 %v79, %v311
  %v313 = vmul.f32 %v84, %v311
  %v314 = vmul.f32 %v89, %v311
  %v315 = vmul.f32 %v94, %v311
  %v316 = vadd.f32 %v312, %v106
  %v317 = vadd.f32 %v313, %v110
  %v318 = vadd.f32 %v314, %v114
  %v319 = vadd.f32 %v315, %v118
  %v320 = vmul.f32 %v316, 0.5
  %v321 = vmul.f32 %v317, 0.5
  %v322 = vmul.f32 %v318, 0.5
  %v323 = vmul.f32 %v319, 0.5
  %v324 = vtanh.pop %v320
  %v325 = vtanh.pop %v321
  %v326 = vtanh.pop %v322
  %v327 = vtanh.pop %v323
  %v328 = vmul.f32 %v324, 0.5
  %v329 = vmul.f32 %v325, 0.5
  %v330 = vmul.f32 %v326, 0.5
  %v331 = vmul.f32 %v327, 0.5
  %v332 = vadd.f32 %v328, 0.5
  %v333 = vadd.f32 %v329, 0.5
  %v334 = vadd.f32 %v330, 0.5
  %v335 = vadd.f32 %v331, 0.5
  %v336 = vmul.f32 %v142, %v332
  %v337 = vmul.f32 %v146, %v333
  %v338 = vmul.f32 %v150, %v334
  %v339 = vmul.f32 %v154, %v335
  %v340 = vadd.f32 %v336, %v337
  %v341 = vadd.f32 %v340, %v338
  %v342 = vadd.f32 %v341, %v339
  %v343 = vrot.slane %v342, 4
  %v344 = vadd.f32 %v342, %v343
  %v345 = vrot.slane %v344, 2
  %v346 = vadd.f32 %v344, %v345
  %v347 = vrot.slane %v346, 1
  %v348 = vadd.f32 %v346, %v347
  %v349 = vadd.f32 %v348, %v171
  %350 = vst [vmem:[%s2 + $0x4] sm:$0x1] %v349
  %v351 = vld [vmem:[%s1 + $0x5] sm:$0x1]
  %v352 = vlaneseq
  %v353 = vshrl.u32 %v352, 7
  %v354 = vsub.s32 0, %v353
  %v355 = vrot.slane %v351, %v354
  %v356 = vmul.f32 %v79, %v355
  %v357 = vmul.f32 %v84, %v355
  %v358 = vmul.f32 %v89, %v355
  %v359 = vmul.f32 %v94, %v355
  %v360 = vadd.f32 %v356, %v106
  %v361 = vadd.f32 %v357, %v110
  %v362 = vadd.f32 %v358, %v114
  %v363 = vadd.f32 %v359, %v118
  %v364 = vmul.f32 %v360, 0.5
  %v365 = vmul.f32 %v361, 0.5
  %v366 = vmul.f32 %v362, 0.5
  %v367 = vmul.f32 %v363, 0.5
  %v368 = vtanh.pop %v364
  %v369 = vtanh.pop %v365
  %v370 = vtanh.pop %v366
  %v371 = vtanh.pop %v367
  %v372 = vmul.f32 %v368, 0.5
  %v373 = vmul.f32 %v369, 0.5
  %v374 = vmul.f32 %v370, 0.5
  %v375 = vmul.f32 %v371, 0.5
  %v376 = vadd.f32 %v372, 0.5
  %v377 = vadd.f32 %v373, 0.5
  %v378 = vadd.f32 %v374, 0.5
  %v379 = vadd.f32 %v375, 0.5
  %v380 = vmul.f32 %v142, %v376
  %v381 = vmul.f32 %v146, %v377
  %v382 = vmul.f32 %v150, %v378
  %v383 = vmul.f32 %v154, %v379
  %v384 = vadd.f32 %v380, %v381
  %v385 = vadd.f32 %v384, %v382
  %v386 = vadd.f32 %v385, %v383
  %v387 = vrot.slane %v386, 4
  %v388 = vadd.f32 %v386, %v387
  %v389 = vrot.slane %v388, 2
  %v390 = vadd.f32 %v388, %v389
  %v391 = vrot.slane %v390, 1
  %v392 = vadd.f32 %v390, %v391
  %v393 = vadd.f32 %v392, %v171
  %394 = vst [vmem:[%s2 + $0x5] sm:$0x1] %v393
  %v395 = vld [vmem:[%s1 + $0x6] sm:$0x1]
  %v396 = vlaneseq
  %v397 = vshrl.u32 %v396, 7
  %v398 = vsub.s32 0, %v397
  %v399 = vrot.slane %v395, %v398
  %v400 = vmul.f32 %v79, %v399
  %v401 = vmul.f32 %v84, %v399
  %v402 = vmul.f32 %v89, %v399
  %v403 = vmul.f32 %v94, %v399
  %v404 = vadd.f32 %v400, %v106
  %v405 = vadd.f32 %v401, %v110
  %v406 = vadd.f32 %v402, %v114
  %v407 = vadd.f32 %v403, %v118
  %v408 = vmul.f32 %v404, 0.5
  %v409 = vmul.f32 %v405, 0.5
  %v410 = vmul.f32 %v406, 0.5
  %v411 = vmul.f32 %v407, 0.5
  %v412 = vtanh.pop %v408
  %v413 = vtanh.pop %v409
  %v414 = vtanh.pop %v410
  %v415 = vtanh.pop %v411
  %v416 = vmul.f32 %v412, 0.5
  %v417 = vmul.f32 %v413, 0.5
  %v418 = vmul.f32 %v414, 0.5
  %v419 = vmul.f32 %v415, 0.5
  %v420 = vadd.f32 %v416, 0.5
  %v421 = vadd.f32 %v417, 0.5
  %v422 = vadd.f32 %v418, 0.5
  %v423 = vadd.f32 %v419, 0.5
  %v424 = vmul.f32 %v142, %v420
  %v425 = vmul.f32 %v146, %v421
  %v426 = vmul.f32 %v150, %v422
  %v427 = vmul.f32 %v154, %v423
  %v428 = vadd.f32 %v424, %v425
  %v429 = vadd.f32 %v428, %v426
  %v430 = vadd.f32 %v429, %v427
  %v431 = vrot.slane %v430, 4
  %v432 = vadd.f32 %v430, %v431
  %v433 = vrot.slane %v432, 2
  %v434 = vadd.f32 %v432, %v433
  %v435 = vrot.slane %v434, 1
  %v436 = vadd.f32 %v434, %v435
  %v437 = vadd.f32 %v436, %v171
  %438 = vst [vmem:[%s2 + $0x6] sm:$0x1] %v437
  %v439 = vld [vmem:[%s1 + $0x7] sm:$0x1]
  %v440 = vlaneseq
  %v441 = vshrl.u32 %v440, 7
  %v442 = vsub.s32 0, %v441
  %v443 = vrot.slane %v439, %v442
  %v444 = vmul.f32 %v79, %v443
  %v445 = vmul.f32 %v84, %v443
  %v446 = vmul.f32 %v89, %v443
  %v447 = vmul.f32 %v94, %v443
  %v448 = vadd.f32 %v444, %v106
  %v449 = vadd.f32 %v445, %v110
  %v450 = vadd.f32 %v446, %v114
  %v451 = vadd.f32 %v447, %v118
  %v452 = vmul.f32 %v448, 0.5
  %v453 = vmul.f32 %v449, 0.5
  %v454 = vmul.f32 %v450, 0.5
  %v455 = vmul.f32 %v451, 0.5
  %v456 = vtanh.pop %v452
  %v457 = vtanh.pop %v453
  %v458 = vtanh.pop %v454
  %v459 = vtanh.pop %v455
  %v460 = vmul.f32 %v456, 0.5
  %v461 = vmul.f32 %v457, 0.5
  %v462 = vmul.f32 %v458, 0.5
  %v463 = vmul.f32 %v459, 0.5
  %v464 = vadd.f32 %v460, 0.5
  %v465 = vadd.f32 %v461, 0.5
  %v466 = vadd.f32 %v462, 0.5
  %v467 = vadd.f32 %v463, 0.5
  %v468 = vmul.f32 %v142, %v464
  %v469 = vmul.f32 %v146, %v465
  %v470 = vmul.f32 %v150, %v466
  %v471 = vmul.f32 %v154, %v467
  %v472 = vadd.f32 %v468, %v469
  %v473 = vadd.f32 %v472, %v470
  %v474 = vadd.f32 %v473, %v471
  %v475 = vrot.slane %v474, 4
  %v476 = vadd.f32 %v474, %v475
  %v477 = vrot.slane %v476, 2
  %v478 = vadd.f32 %v476, %v477
  %v479 = vrot.slane %v478, 1
  %v480 = vadd.f32 %v478, %v479
  %v481 = vadd.f32 %v480, %v171
  %482 = vst [vmem:[%s2 + $0x7] sm:$0x1] %v481
  // Predicated region
  $region10: #{_mlp_bbb_forward_impl.1} parent=0 // pred_check
    _
  $region11: #{_mlp_bbb_forward_impl.1} parent=0 // pred_check_branch
    %484 = sbr.rel (0) target = $region13
  $region12: #{_mlp_bbb_forward_impl.1} parent=0 // pred_region
    _
  $region13: #{_mlp_bbb_forward_impl.1} parent=0 // pred_fallthru
    _
  // Predicated region
  $region14: #{_mlp_bbb_forward_impl.1} parent=0 // pred_check
    _
  $region15: #{_mlp_bbb_forward_impl.1} parent=0 // pred_check_branch
    %486 = sbr.rel (0) target = $region17
  $region16: #{_mlp_bbb_forward_impl.1} parent=0 // pred_region
    _
  $region17: #{_mlp_bbb_forward_impl.1} parent=0 // pred_fallthru
    _

</llo_original>
